<compile_context>
chip_gen: v7x
topology: tpu7x:2x2x1
jax: 0.10.0
libtpu: 0.0.40
codegen_flags: <defaults>
</compile_context>

<pallas_src>
import functools
import math

import jax
import jax.numpy as jnp
from jax.experimental import pallas as pl
from jax.experimental.pallas import tpu as pltpu

_LOG_2PI = math.log(2.0 * math.pi)


def _actor_kernel(*refs, max_action: float, deterministic: bool,
                  action_dim: int, mm_dtype):
    if deterministic:
        (state_ref,
         w1_ref, b1_ref, w2_ref, b2_ref, w3_ref, b3_ref,
         wh_ref, bh_ref, act_ref, lp_ref) = refs
        noise = None
    else:
        (state_ref, noise_ref,
         w1_ref, b1_ref, w2_ref, b2_ref, w3_ref, b3_ref,
         wh_ref, bh_ref, act_ref, lp_ref) = refs
        noise = noise_ref[...]                      # f32

    def mm(x, w_ref):
        # Inputs are already in mm_dtype; f32 MXU accumulation.
        return jnp.dot(x, w_ref[...], preferred_element_type=jnp.float32)

    # trunk: 3x (Linear -> ReLU).  Bias-add + ReLU in f32, then a single fused
    # cast back to mm_dtype (same numerics as casting at the next dot, but the
    # [bt, H] intermediate lives in VMEM at half width).
    h = state_ref[...]                              # mm_dtype (cast in wrapper)
    h = jnp.maximum(mm(h, w1_ref) + b1_ref[...], 0.0).astype(mm_dtype)
    h = jnp.maximum(mm(h, w2_ref) + b2_ref[...], 0.0).astype(mm_dtype)
    h = jnp.maximum(mm(h, w3_ref) + b3_ref[...], 0.0).astype(mm_dtype)

    # fused heads: one [bt, H] @ [H, 2A] matmul, then static lane slices
    heads = mm(h, wh_ref) + bh_ref[...]             # [bt, 2A] f32
    mu = heads[:, :action_dim]
    log_std = jnp.clip(heads[:, action_dim:2 * action_dim], -20.0, 2.0)

    if deterministic:
        action = mu
        # z == 0, so Normal log_prob reduces to -log_std - 0.5*log(2*pi)
        log_prob = jnp.sum(-log_std - 0.5 * _LOG_2PI, axis=-1, keepdims=True)
    else:
        std = jnp.exp(log_std)
        action = mu + std * noise                   # rsample
        # (action - mu) / std == noise exactly -> no second exp needed
        log_prob = jnp.sum(-0.5 * noise * noise - log_std - 0.5 * _LOG_2PI,
                           axis=-1, keepdims=True)

    tanh_action = jnp.tanh(action)
    # tanh correction: - sum log(1 - tanh(a)^2 + 1e-6)   (matches torch; the
    # 1e-6 floor dominates when 1 - tanh^2 underflows, same as the reference)
    log_prob = log_prob - jnp.sum(
        jnp.log(1.0 - tanh_action * tanh_action + 1e-6), axis=-1, keepdims=True)

    # Narrow, separate outputs (small HBM writeback; see header).
    act_ref[...] = (tanh_action * max_action).astype(act_ref.dtype)
    lp_ref[...] = log_prob.astype(lp_ref.dtype)


def actor_forward(state, params, noise=None, *, max_action=1.0,
                  deterministic=False, batch_tile=1024,
                  mm_dtype=jnp.bfloat16, vmem_limit_bytes=None,
                  weight_buffer_count=None, core_parallel=False):
    """Actor forward pass.

    Returns (tanh_action * max_action [B, A], log_prob [B]).

    mm_dtype=jnp.float32 is the parity escape hatch (no bf16 casting anywhere).
    weight_buffer_count=1 single-buffers the grid-invariant weight blocks
    (worth it only when hidden_dim is scaled up).  core_parallel=True requests
    CORE_PARALLEL on the batch axis (v7x megacore), verify with a profile.
    """
    B, S = state.shape
    H = params["w1"].shape[1]
    A = params["wm"].shape[1]
    if not deterministic:
        assert noise is not None and noise.shape == (B, A)

    # ---- batch tiling: big MXU-friendly tiles, pad B if needed -------------
    bt = min(batch_tile, B)
    if bt < B:
        bt = max(8, (bt // 8) * 8)                  # keep (8,128) sublane rule
    B_pad = ((B + bt - 1) // bt) * bt
    grid = (B_pad // bt,)

    # Cast activations / weights to the matmul dtype ONCE in the wrapper
    # (halves the state + weight HBM streams when mm_dtype=bf16).
    state = state.astype(mm_dtype)
    if B_pad != B:
        state = jnp.pad(state, ((0, B_pad - B), (0, 0)))
        if noise is not None and not deterministic:
            noise = jnp.pad(noise, ((0, B_pad - B), (0, 0)))

    w1 = params["w1"].astype(mm_dtype)
    w2 = params["w2"].astype(mm_dtype)
    w3 = params["w3"].astype(mm_dtype)
    wh = jnp.concatenate([params["wm"], params["ws"]], axis=1).astype(mm_dtype)
    b1 = params["b1"].astype(jnp.float32)
    b2 = params["b2"].astype(jnp.float32)
    b3 = params["b3"].astype(jnp.float32)
    bh = jnp.concatenate([params["bm"], params["bs"]], axis=1).astype(jnp.float32)

    # ---- BlockSpecs ---------------------------------------------------------
    w_mode = pl.Buffered(weight_buffer_count) if weight_buffer_count else None

    def full_spec(shape):                           # grid-invariant block (0,0)
        if w_mode is None:
            return pl.BlockSpec(shape, lambda i: (0, 0))
        return pl.BlockSpec(shape, lambda i: (0, 0), pipeline_mode=w_mode)

    batched = lambda last: pl.BlockSpec((bt, last), lambda i: (i, 0))

    in_specs = [batched(S)]
    args = [state]
    if not deterministic:
        in_specs.append(batched(A))                 # noise only when sampling
        args.append(noise.astype(jnp.float32))
    in_specs += [
        full_spec((S, H)), full_spec((1, H)),       # w1, b1
        full_spec((H, H)), full_spec((1, H)),       # w2, b2
        full_spec((H, H)), full_spec((1, H)),       # w3, b3
        full_spec((H, 2 * A)), full_spec((1, 2 * A)),  # fused mu/log_std head
    ]
    args += [w1, b1, w2, b2, w3, b3, wh, bh]

    out_shape = (jax.ShapeDtypeStruct((B_pad, A), jnp.float32),
                 jax.ShapeDtypeStruct((B_pad, 1), jnp.float32))
    out_specs = (batched(A), batched(1))

    # ---- cost estimate (scheduling hint) ------------------------------------
    itm = jnp.dtype(mm_dtype).itemsize
    w_bytes = (S * H + 2 * H * H + H * 2 * A) * itm + (3 * H + 2 * A) * 4
    in_bytes = B_pad * S * itm + (0 if deterministic else B_pad * A * 4)
    out_bytes = B_pad * (A + 1) * 4
    cost = pl.CostEstimate(
        flops=2 * B_pad * (S * H + 2 * H * H + H * 2 * A),
        transcendentals=3 * B_pad * A,              # exp, tanh, log per element
        bytes_accessed=in_bytes + w_bytes + out_bytes)

    # ---- VMEM budget (never more restrictive than the 32 MiB default) -------
    if vmem_limit_bytes is None:
        bufs = weight_buffer_count or 2             # double-buffered by default
        io_bytes = 2 * (bt * S * itm
                        + (0 if deterministic else bt * A * 4)
                        + bt * (A + 1) * 4)
        tmp_bytes = 8 * bt * max(H, 2 * A) * 4      # f32 temporaries, generous
        vmem_limit_bytes = max(bufs * w_bytes + io_bytes + tmp_bytes + (8 << 20),
                               32 << 20)

    dim_sem = (pltpu.CORE_PARALLEL,) if core_parallel else (pltpu.PARALLEL,)

    kernel = functools.partial(
        _actor_kernel, max_action=float(max_action),
        deterministic=deterministic, action_dim=A, mm_dtype=mm_dtype)

    out_a, out_lp = pl.pallas_call(
        kernel,
        out_shape=out_shape,
        grid_spec=pltpu.PrefetchScalarGridSpec(
            num_scalar_prefetch=0,
            grid=grid,
            in_specs=in_specs,
            out_specs=out_specs,
        ),
        compiler_params=pltpu.CompilerParams(
            dimension_semantics=dim_sem,
            vmem_limit_bytes=int(vmem_limit_bytes)),
        cost_estimate=cost,
    )(*args)

    return out_a[:B], out_lp[:B, 0]


def init_actor_params(key, state_dim, action_dim, hidden_dim=256, edac_init=True):
    """Parameter init mirroring the PyTorch module (weights stored [in, out])."""
    keys = jax.random.split(key, 10)

    def torch_linear_w(k, fan_in, fan_out):
        bound = 1.0 / math.sqrt(fan_in)
        return jax.random.uniform(k, (fan_in, fan_out), jnp.float32, -bound, bound)

    def torch_linear_b(k, fan_in, fan_out):
        bound = 1.0 / math.sqrt(fan_in)
        return jax.random.uniform(k, (1, fan_out), jnp.float32, -bound, bound)

    params = {
        "w1": torch_linear_w(keys[0], state_dim, hidden_dim),
        "b1": torch_linear_b(keys[1], state_dim, hidden_dim),
        "w2": torch_linear_w(keys[2], hidden_dim, hidden_dim),
        "b2": torch_linear_b(keys[3], hidden_dim, hidden_dim),
        "w3": torch_linear_w(keys[4], hidden_dim, hidden_dim),
        "b3": torch_linear_b(keys[5], hidden_dim, hidden_dim),
        "wm": torch_linear_w(keys[6], hidden_dim, action_dim),
        "bm": torch_linear_b(keys[7], hidden_dim, action_dim),
        "ws": torch_linear_w(keys[8], hidden_dim, action_dim),
        "bs": torch_linear_b(keys[9], hidden_dim, action_dim),
    }
    if edac_init:
        params["b1"] = jnp.full_like(params["b1"], 0.1)
        params["b2"] = jnp.full_like(params["b2"], 0.1)
        params["b3"] = jnp.full_like(params["b3"], 0.1)
        params["wm"] = jax.random.uniform(keys[6], params["wm"].shape, jnp.float32, -0.001, 0.001)
        params["bm"] = jax.random.uniform(keys[7], params["bm"].shape, jnp.float32, -0.001, 0.001)
        params["ws"] = jax.random.uniform(keys[8], params["ws"].shape, jnp.float32, -0.001, 0.001)
        params["bs"] = jax.random.uniform(keys[9], params["bs"].shape, jnp.float32, -0.001, 0.001)
    return params


def _reference_forward(state, noise, params, max_action=1.0, deterministic=False,
                       mm_dtype=jnp.bfloat16):
    """Pure-JAX reference with the same matmul-dtype casting for a sanity check."""
    def mm(x, w):
        return jnp.dot(x.astype(mm_dtype), w.astype(mm_dtype),
                       preferred_element_type=jnp.float32)

    h = jnp.maximum(mm(state, params["w1"]) + params["b1"], 0.0)
    h = jnp.maximum(mm(h, params["w2"]) + params["b2"], 0.0)
    h = jnp.maximum(mm(h, params["w3"]) + params["b3"], 0.0)
    mu = mm(h, params["wm"]) + params["bm"]
    log_std = jnp.clip(mm(h, params["ws"]) + params["bs"], -20.0, 2.0)
    std = jnp.exp(log_std)
    action = mu if deterministic else mu + std * noise
    tanh_a = jnp.tanh(action)
    lp = (-0.5 * ((action - mu) / std) ** 2 - log_std
          - 0.5 * math.log(2.0 * math.pi)).sum(-1)
    lp = lp - jnp.log(1.0 - tanh_a ** 2 + 1e-6).sum(-1)
    return tanh_a * max_action, lp


if __name__ == "__main__":
    # --- test 1: small, module-consistent shapes (single tile) ---------------
    batch, state_dim, action_dim, hidden_dim = 16, 8, 4, 32
    max_action = 1.0

    root = jax.random.PRNGKey(0)
    k_params, k_state, k_noise = jax.random.split(root, 3)

    params = init_actor_params(k_params, state_dim, action_dim, hidden_dim, edac_init=True)
    state = jax.random.normal(k_state, (batch, state_dim), jnp.float32)
    noise = jax.random.normal(k_noise, (batch, action_dim), jnp.float32)  # eps for rsample

    # stochastic (rsample) path
    tanh_action, log_prob = actor_forward(
        state, params, noise, max_action=max_action, deterministic=False)
    jax.block_until_ready((tanh_action, log_prob))

    ref_a, ref_lp = _reference_forward(state, noise, params, max_action, deterministic=False)
    assert tanh_action.shape == (batch, action_dim)
    assert log_prob.shape == (batch,)
    assert jnp.allclose(tanh_action, ref_a, atol=1e-3, rtol=1e-3), "action mismatch"
    assert jnp.allclose(log_prob, ref_lp, atol=1e-2, rtol=1e-3), "log_prob mismatch"

    # deterministic path (no noise input / DMA at all)
    det_action, det_log_prob = actor_forward(
        state, params, max_action=max_action, deterministic=True)
    jax.block_until_ready((det_action, det_log_prob))

    ref_da, ref_dlp = _reference_forward(state, noise, params, max_action, deterministic=True)
    assert jnp.allclose(det_action, ref_da, atol=1e-3, rtol=1e-3), "det action mismatch"
    assert jnp.allclose(det_log_prob, ref_dlp, atol=1e-2, rtol=1e-3), "det log_prob mismatch"

    # --- test 2: multi-tile + batch padding path ------------------------------
    B2, S2, A2, H2 = 300, 10, 5, 64
    k2p, k2s, k2n = jax.random.split(jax.random.PRNGKey(1), 3)
    params2 = init_actor_params(k2p, S2, A2, H2, edac_init=True)
    state2 = jax.random.normal(k2s, (B2, S2), jnp.float32)
    noise2 = jax.random.normal(k2n, (B2, A2), jnp.float32)

    a2, lp2 = actor_forward(state2, params2, noise2, max_action=2.5,
                            deterministic=False, batch_tile=128)
    jax.block_until_ready((a2, lp2))
    ra2, rlp2 = _reference_forward(state2, noise2, params2, 2.5, deterministic=False)
    assert a2.shape == (B2, A2) and lp2.shape == (B2,)
    assert jnp.allclose(a2, ra2, atol=1e-3, rtol=1e-3), "tiled action mismatch"
    assert jnp.allclose(lp2, rlp2, atol=1e-2, rtol=1e-3), "tiled log_prob mismatch"

    print("KERNEL_OK")
</pallas_src>

<mosaic_0001>
module attributes {stable_mosaic.version = 11 : i64} {
  func.func @_actor_kernel(%arg0: i32, %arg1: memref<16x8xbf16, #tpu.memory_space<vmem>>, %arg2: memref<16x4xf32, #tpu.memory_space<vmem>>, %arg3: memref<8x32xbf16, #tpu.memory_space<vmem>>, %arg4: memref<1x32xf32, #tpu.memory_space<vmem>>, %arg5: memref<32x32xbf16, #tpu.memory_space<vmem>>, %arg6: memref<1x32xf32, #tpu.memory_space<vmem>>, %arg7: memref<32x32xbf16, #tpu.memory_space<vmem>>, %arg8: memref<1x32xf32, #tpu.memory_space<vmem>>, %arg9: memref<32x8xbf16, #tpu.memory_space<vmem>>, %arg10: memref<1x8xf32, #tpu.memory_space<vmem>>, %arg11: memref<16x4xf32, #tpu.memory_space<vmem>>, %arg12: memref<16x1xf32, #tpu.memory_space<vmem>>) attributes {dimension_semantics = [#tpu.dimension_semantics<parallel>], iteration_bounds = array<i64: 1>, scalar_prefetch = 0 : i64, scratch_operands = 0 : i64, tpu.core_type = #tpu.core_type<tc>, window_params = [{transform_indices = @transform_0, window_bounds = array<i64: 16, 8>}, {transform_indices = @transform_1, window_bounds = array<i64: 16, 4>}, {pipeline_mode = #tpu.pipeline_mode<synchronous>, transform_indices = @transform_2, window_bounds = array<i64: 8, 32>}, {pipeline_mode = #tpu.pipeline_mode<synchronous>, transform_indices = @transform_3, window_bounds = array<i64: 1, 32>}, {pipeline_mode = #tpu.pipeline_mode<synchronous>, transform_indices = @transform_4, window_bounds = array<i64: 32, 32>}, {pipeline_mode = #tpu.pipeline_mode<synchronous>, transform_indices = @transform_5, window_bounds = array<i64: 1, 32>}, {pipeline_mode = #tpu.pipeline_mode<synchronous>, transform_indices = @transform_6, window_bounds = array<i64: 32, 32>}, {pipeline_mode = #tpu.pipeline_mode<synchronous>, transform_indices = @transform_7, window_bounds = array<i64: 1, 32>}, {pipeline_mode = #tpu.pipeline_mode<synchronous>, transform_indices = @transform_8, window_bounds = array<i64: 32, 8>}, {pipeline_mode = #tpu.pipeline_mode<synchronous>, transform_indices = @transform_9, window_bounds = array<i64: 1, 8>}, {transform_indices = @transform_10, window_bounds = array<i64: 16, 4>}, {transform_indices = @transform_11, window_bounds = array<i64: 16, 1>}]} {
    %c0 = arith.constant 0 : index
    %c0_0 = arith.constant 0 : index
    %0 = vector.load %arg2[%c0, %c0_0] : memref<16x4xf32, #tpu.memory_space<vmem>>, vector<16x4xf32>
    %c0_1 = arith.constant 0 : index
    %c0_2 = arith.constant 0 : index
    %1 = vector.load %arg1[%c0_1, %c0_2] : memref<16x8xbf16, #tpu.memory_space<vmem>>, vector<16x8xbf16>
    %c0_3 = arith.constant 0 : index
    %c0_4 = arith.constant 0 : index
    %2 = vector.load %arg3[%c0_3, %c0_4] : memref<8x32xbf16, #tpu.memory_space<vmem>>, vector<8x32xbf16>
    %cst = arith.constant dense<0.000000e+00> : vector<16x32xf32>
    %3 = tpu.matmul %1, %2, %cst {dimension_numbers = #tpu.dot_dimension_numbers<[1], [0], [0], [1], [0, 0, 1, 1], [], []>} : vector<16x8xbf16>, vector<8x32xbf16>, vector<16x32xf32> -> vector<16x32xf32>
    %c0_5 = arith.constant 0 : index
    %c0_6 = arith.constant 0 : index
    %4 = vector.load %arg4[%c0_5, %c0_6] : memref<1x32xf32, #tpu.memory_space<vmem>>, vector<1x32xf32>
    %5 = vector.broadcast %4 : vector<1x32xf32> to vector<16x32xf32>
    %6 = arith.addf %3, %5 : vector<16x32xf32>
    %cst_7 = arith.constant 0.000000e+00 : f32
    %7 = vector.broadcast %cst_7 : f32 to vector<16x32xf32>
    %8 = arith.maximumf %6, %7 : vector<16x32xf32>
    %9 = arith.truncf %8 : vector<16x32xf32> to vector<16x32xbf16>
    %c0_8 = arith.constant 0 : index
    %c0_9 = arith.constant 0 : index
    %10 = vector.load %arg5[%c0_8, %c0_9] : memref<32x32xbf16, #tpu.memory_space<vmem>>, vector<32x32xbf16>
    %cst_10 = arith.constant dense<0.000000e+00> : vector<16x32xf32>
    %11 = tpu.matmul %9, %10, %cst_10 {dimension_numbers = #tpu.dot_dimension_numbers<[1], [0], [0], [1], [0, 0, 1, 1], [], []>} : vector<16x32xbf16>, vector<32x32xbf16>, vector<16x32xf32> -> vector<16x32xf32>
    %c0_11 = arith.constant 0 : index
    %c0_12 = arith.constant 0 : index
    %12 = vector.load %arg6[%c0_11, %c0_12] : memref<1x32xf32, #tpu.memory_space<vmem>>, vector<1x32xf32>
    %13 = vector.broadcast %12 : vector<1x32xf32> to vector<16x32xf32>
    %14 = arith.addf %11, %13 : vector<16x32xf32>
    %cst_13 = arith.constant 0.000000e+00 : f32
    %15 = vector.broadcast %cst_13 : f32 to vector<16x32xf32>
    %16 = arith.maximumf %14, %15 : vector<16x32xf32>
    %17 = arith.truncf %16 : vector<16x32xf32> to vector<16x32xbf16>
    %c0_14 = arith.constant 0 : index
    %c0_15 = arith.constant 0 : index
    %18 = vector.load %arg7[%c0_14, %c0_15] : memref<32x32xbf16, #tpu.memory_space<vmem>>, vector<32x32xbf16>
    %cst_16 = arith.constant dense<0.000000e+00> : vector<16x32xf32>
    %19 = tpu.matmul %17, %18, %cst_16 {dimension_numbers = #tpu.dot_dimension_numbers<[1], [0], [0], [1], [0, 0, 1, 1], [], []>} : vector<16x32xbf16>, vector<32x32xbf16>, vector<16x32xf32> -> vector<16x32xf32>
    %c0_17 = arith.constant 0 : index
    %c0_18 = arith.constant 0 : index
    %20 = vector.load %arg8[%c0_17, %c0_18] : memref<1x32xf32, #tpu.memory_space<vmem>>, vector<1x32xf32>
    %21 = vector.broadcast %20 : vector<1x32xf32> to vector<16x32xf32>
    %22 = arith.addf %19, %21 : vector<16x32xf32>
    %cst_19 = arith.constant 0.000000e+00 : f32
    %23 = vector.broadcast %cst_19 : f32 to vector<16x32xf32>
    %24 = arith.maximumf %22, %23 : vector<16x32xf32>
    %25 = arith.truncf %24 : vector<16x32xf32> to vector<16x32xbf16>
    %c0_20 = arith.constant 0 : index
    %c0_21 = arith.constant 0 : index
    %26 = vector.load %arg9[%c0_20, %c0_21] : memref<32x8xbf16, #tpu.memory_space<vmem>>, vector<32x8xbf16>
    %cst_22 = arith.constant dense<0.000000e+00> : vector<16x8xf32>
    %27 = tpu.matmul %25, %26, %cst_22 {dimension_numbers = #tpu.dot_dimension_numbers<[1], [0], [0], [1], [0, 0, 1, 1], [], []>} : vector<16x32xbf16>, vector<32x8xbf16>, vector<16x8xf32> -> vector<16x8xf32>
    %c0_23 = arith.constant 0 : index
    %c0_24 = arith.constant 0 : index
    %28 = vector.load %arg10[%c0_23, %c0_24] : memref<1x8xf32, #tpu.memory_space<vmem>>, vector<1x8xf32>
    %29 = vector.broadcast %28 : vector<1x8xf32> to vector<16x8xf32>
    %30 = arith.addf %27, %29 : vector<16x8xf32>
    %31 = vector.extract_strided_slice %30 {offsets = [0, 0], sizes = [16, 4], strides = [1, 1]} : vector<16x8xf32> to vector<16x4xf32>
    %32 = vector.extract_strided_slice %30 {offsets = [0, 4], sizes = [16, 4], strides = [1, 1]} : vector<16x8xf32> to vector<16x4xf32>
    %cst_25 = arith.constant -2.000000e+01 : f32
    %cst_26 = arith.constant 2.000000e+00 : f32
    %33 = vector.broadcast %cst_25 : f32 to vector<16x4xf32>
    %34 = arith.maximumf %33, %32 : vector<16x4xf32>
    %35 = vector.broadcast %cst_26 : f32 to vector<16x4xf32>
    %36 = arith.minimumf %35, %34 : vector<16x4xf32>
    %37 = math.exp %36 : vector<16x4xf32>
    %38 = arith.mulf %37, %0 : vector<16x4xf32>
    %39 = arith.addf %31, %38 : vector<16x4xf32>
    %cst_27 = arith.constant -5.000000e-01 : f32
    %40 = vector.broadcast %cst_27 : f32 to vector<16x4xf32>
    %41 = arith.mulf %40, %0 : vector<16x4xf32>
    %42 = arith.mulf %41, %0 : vector<16x4xf32>
    %43 = arith.subf %42, %36 : vector<16x4xf32>
    %cst_28 = arith.constant 0.918938517 : f32
    %44 = vector.broadcast %cst_28 : f32 to vector<16x4xf32>
    %45 = arith.subf %43, %44 : vector<16x4xf32>
    %cst_29 = arith.constant dense<0.000000e+00> : vector<16xf32>
    %46 = vector.multi_reduction <add>, %45, %cst_29 [1] : vector<16x4xf32> to vector<16xf32>
    %47 = vector.shape_cast %46 : vector<16xf32> to vector<16x1xf32>
    %48 = math.tanh %39 : vector<16x4xf32>
    %49 = arith.mulf %48, %48 : vector<16x4xf32>
    %cst_30 = arith.constant 1.000000e+00 : f32
    %50 = vector.broadcast %cst_30 : f32 to vector<16x4xf32>
    %51 = arith.subf %50, %49 : vector<16x4xf32>
    %cst_31 = arith.constant 9.99999997E-7 : f32
    %52 = vector.broadcast %cst_31 : f32 to vector<16x4xf32>
    %53 = arith.addf %51, %52 : vector<16x4xf32>
    %54 = math.log %53 : vector<16x4xf32>
    %cst_32 = arith.constant dense<0.000000e+00> : vector<16xf32>
    %55 = vector.multi_reduction <add>, %54, %cst_32 [1] : vector<16x4xf32> to vector<16xf32>
    %56 = vector.shape_cast %55 : vector<16xf32> to vector<16x1xf32>
    %57 = arith.subf %47, %56 : vector<16x1xf32>
    %cst_33 = arith.constant 1.000000e+00 : f32
    %58 = vector.broadcast %cst_33 : f32 to vector<16x4xf32>
    %59 = arith.mulf %48, %58 : vector<16x4xf32>
    %c0_34 = arith.constant 0 : index
    %c0_35 = arith.constant 0 : index
    %60 = vector.load %arg11[%c0_34, %c0_35] : memref<16x4xf32, #tpu.memory_space<vmem>>, vector<16x4xf32>
    tpu.vector_store %arg11[%c0_34, %c0_35], %59 {strides = array<i32>} : memref<16x4xf32, #tpu.memory_space<vmem>>, vector<16x4xf32>,
    %c0_36 = arith.constant 0 : index
    %c0_37 = arith.constant 0 : index
    %61 = vector.load %arg12[%c0_36, %c0_37] : memref<16x1xf32, #tpu.memory_space<vmem>>, vector<16x1xf32>
    tpu.vector_store %arg12[%c0_36, %c0_37], %57 {strides = array<i32>} : memref<16x1xf32, #tpu.memory_space<vmem>>, vector<16x1xf32>,
    return
  }
  func.func @transform_0(%arg0: i32) -> (i32, i32) {
    %c0_i32 = arith.constant 0 : i32
    %c0_i32_0 = arith.constant 0 : i32
    return %arg0, %c0_i32 : i32, i32
  }
  func.func @transform_1(%arg0: i32) -> (i32, i32) {
    %c0_i32 = arith.constant 0 : i32
    %c0_i32_0 = arith.constant 0 : i32
    return %arg0, %c0_i32 : i32, i32
  }
  func.func @transform_2(%arg0: i32) -> (i32, i32) {
    %c0_i32 = arith.constant 0 : i32
    %c0_i32_0 = arith.constant 0 : i32
    %c0_i32_1 = arith.constant 0 : i32
    return %c0_i32, %c0_i32_0 : i32, i32
  }
  func.func @transform_3(%arg0: i32) -> (i32, i32) {
    %c0_i32 = arith.constant 0 : i32
    %c0_i32_0 = arith.constant 0 : i32
    %c0_i32_1 = arith.constant 0 : i32
    return %c0_i32, %c0_i32_0 : i32, i32
  }
  func.func @transform_4(%arg0: i32) -> (i32, i32) {
    %c0_i32 = arith.constant 0 : i32
    %c0_i32_0 = arith.constant 0 : i32
    %c0_i32_1 = arith.constant 0 : i32
    return %c0_i32, %c0_i32_0 : i32, i32
  }
  func.func @transform_5(%arg0: i32) -> (i32, i32) {
    %c0_i32 = arith.constant 0 : i32
    %c0_i32_0 = arith.constant 0 : i32
    %c0_i32_1 = arith.constant 0 : i32
    return %c0_i32, %c0_i32_0 : i32, i32
  }
  func.func @transform_6(%arg0: i32) -> (i32, i32) {
    %c0_i32 = arith.constant 0 : i32
    %c0_i32_0 = arith.constant 0 : i32
    %c0_i32_1 = arith.constant 0 : i32
    return %c0_i32, %c0_i32_0 : i32, i32
  }
  func.func @transform_7(%arg0: i32) -> (i32, i32) {
    %c0_i32 = arith.constant 0 : i32
    %c0_i32_0 = arith.constant 0 : i32
    %c0_i32_1 = arith.constant 0 : i32
    return %c0_i32, %c0_i32_0 : i32, i32
  }
  func.func @transform_8(%arg0: i32) -> (i32, i32) {
    %c0_i32 = arith.constant 0 : i32
    %c0_i32_0 = arith.constant 0 : i32
    %c0_i32_1 = arith.constant 0 : i32
    return %c0_i32, %c0_i32_0 : i32, i32
  }
  func.func @transform_9(%arg0: i32) -> (i32, i32) {
    %c0_i32 = arith.constant 0 : i32
    %c0_i32_0 = arith.constant 0 : i32
    %c0_i32_1 = arith.constant 0 : i32
    return %c0_i32, %c0_i32_0 : i32, i32
  }
  func.func @transform_10(%arg0: i32) -> (i32, i32) {
    %c0_i32 = arith.constant 0 : i32
    %c0_i32_0 = arith.constant 0 : i32
    return %arg0, %c0_i32 : i32, i32
  }
  func.func @transform_11(%arg0: i32) -> (i32, i32) {
    %c0_i32 = arith.constant 0 : i32
    %c0_i32_0 = arith.constant 0 : i32
    return %arg0, %c0_i32 : i32, i32
  }
}

</mosaic_0001>

<llo_original>
// kernel: tpu_custom_call.1
$region0: #{tpu_custom_call.1}
  #allocation0 [shape = 'u32[]', space=smem, size = 0x4, offset = 0x4, fixed_abs, tag = 'smem constant byte address 0x4 - core index']
  #allocation1 [shape = 'u32[144,128]{1,0:T(1,128)}', space=vmem, size = 0x12000, scoped, tag = 'internal scratch']
  %s0 = inlined_call_operand.vmem [shape: bf16[16,8], index: 0, kind: input, shape index: {}]
  %s1 = inlined_call_operand.vmem [shape: f32[16,4], index: 1, kind: input, shape index: {}]
  %s2 = inlined_call_operand.vmem [shape: bf16[8,32], index: 2, kind: input, shape index: {}]
  %s3 = inlined_call_operand.vmem [shape: f32[1,32], index: 3, kind: input, shape index: {}]
  %s4 = inlined_call_operand.vmem [shape: bf16[32,32], index: 4, kind: input, shape index: {}]
  %s5 = inlined_call_operand.vmem [shape: f32[1,32], index: 5, kind: input, shape index: {}]
  %s6 = inlined_call_operand.vmem [shape: bf16[32,32], index: 6, kind: input, shape index: {}]
  %s7 = inlined_call_operand.vmem [shape: f32[1,32], index: 7, kind: input, shape index: {}]
  %s8 = inlined_call_operand.vmem [shape: bf16[32,8], index: 8, kind: input, shape index: {}]
  %s9 = inlined_call_operand.vmem [shape: f32[1,8], index: 9, kind: input, shape index: {}]
  %s10 = inlined_call_operand.vmem [shape: f32[16,4], index: 10, kind: output, shape index: {0}]
  %s11 = inlined_call_operand.vmem [shape: f32[16,1], index: 11, kind: output, shape index: {1}]
  %12 = xla_tuple %s10, %s11
  %s13 = sld [smem:[#allocation0]]
  $region58: #{tpu_custom_call.1} parent=0
    _
  %s15 = ssub.s32 1, %s13
  %s16 = scalar_select 0, %s15, %s13
  // Predicated region
  $region2: #{tpu_custom_call.1} parent=0 // pred_check
    _
  $region3: #{tpu_custom_call.1} parent=0 // pred_check_branch
    %18 = sbr.rel (0) target = $region5
  $region4: #{tpu_custom_call.1} parent=0 // pred_region
    _
  $region5: #{tpu_custom_call.1} parent=0 // pred_fallthru
    _
  // Predicated region
  $region6: #{tpu_custom_call.1} parent=0 // pred_check
    _
  $region7: #{tpu_custom_call.1} parent=0 // pred_check_branch
    %20 = sbr.rel (0) target = $region9
  $region8: #{tpu_custom_call.1} parent=0 // pred_region
    _
  $region9: #{tpu_custom_call.1} parent=0 // pred_fallthru
    _
  // Predicated region
  $region10: #{tpu_custom_call.1} parent=0 // pred_check
    _
  $region11: #{tpu_custom_call.1} parent=0 // pred_check_branch
    %22 = sbr.rel (0) target = $region13
  $region12: #{tpu_custom_call.1} parent=0 // pred_region
    _
  $region13: #{tpu_custom_call.1} parent=0 // pred_fallthru
    _
  // Predicated region
  $region14: #{tpu_custom_call.1} parent=0 // pred_check
    _
  $region15: #{tpu_custom_call.1} parent=0 // pred_check_branch
    %24 = sbr.rel (0) target = $region17
  $region16: #{tpu_custom_call.1} parent=0 // pred_region
    _
  $region17: #{tpu_custom_call.1} parent=0 // pred_fallthru
    _
  // Predicated region
  $region18: #{tpu_custom_call.1} parent=0 // pred_check
    _
  $region19: #{tpu_custom_call.1} parent=0 // pred_check_branch
    %26 = sbr.rel (0) target = $region21
  $region20: #{tpu_custom_call.1} parent=0 // pred_region
    _
  $region21: #{tpu_custom_call.1} parent=0 // pred_fallthru
    _
  // Predicated region
  $region22: #{tpu_custom_call.1} parent=0 // pred_check
    _
  $region23: #{tpu_custom_call.1} parent=0 // pred_check_branch
    %28 = sbr.rel (0) target = $region25
  $region24: #{tpu_custom_call.1} parent=0 // pred_region
    _
  $region25: #{tpu_custom_call.1} parent=0 // pred_fallthru
    _
  // Predicated region
  $region26: #{tpu_custom_call.1} parent=0 // pred_check
    _
  $region27: #{tpu_custom_call.1} parent=0 // pred_check_branch
    %30 = sbr.rel (0) target = $region29
  $region28: #{tpu_custom_call.1} parent=0 // pred_region
    _
  $region29: #{tpu_custom_call.1} parent=0 // pred_fallthru
    _
  // Predicated region
  $region30: #{tpu_custom_call.1} parent=0 // pred_check
    _
  $region31: #{tpu_custom_call.1} parent=0 // pred_check_branch
    %32 = sbr.rel (0) target = $region33
  $region32: #{tpu_custom_call.1} parent=0 // pred_region
    _
  $region33: #{tpu_custom_call.1} parent=0 // pred_fallthru
    _
  // Predicated region
  $region34: #{tpu_custom_call.1} parent=0 // pred_check
    _
  $region35: #{tpu_custom_call.1} parent=0 // pred_check_branch
    %34 = sbr.rel (0) target = $region37
  $region36: #{tpu_custom_call.1} parent=0 // pred_region
    _
  $region37: #{tpu_custom_call.1} parent=0 // pred_fallthru
    _
  // Predicated region
  $region38: #{tpu_custom_call.1} parent=0 // pred_check
    _
  $region39: #{tpu_custom_call.1} parent=0 // pred_check_branch
    %36 = sbr.rel (0) target = $region41
  $region40: #{tpu_custom_call.1} parent=0 // pred_region
    _
  $region41: #{tpu_custom_call.1} parent=0 // pred_fallthru
    _
  %v38 = vld [vmem:[%s1] sm:$0xff]
  %v39 = vld [vmem:[%s1 + $0x8] sm:$0xff]
  %v40 = vld [vmem:[%s0] sm:$0xf]
  %v41 = vld [vmem:[%s0 + $0x4] sm:$0xf]
  %v42 = vld [vmem:[%s2] sm:$0xf]
  %v43 = vld [vmem:[%s3] sm:$0x1]
  %v45 = vlaneseq
  %v46 = vshrl.u32 %v45, 7
  %v47 = vsub.s32 0, %v46
  %v48 = vrot.slane %v43, %v47
  %v52 = vunpack.c.l.b16 %v40
  %v53 = vunpack.c.l.b16 %v41
  %v54 = vpack.c.b16 %v53, %v52
  %vm55 = vcmask 64512
  %v57 = vsel %vm55, %v54, 0
  %vm59 = vcmask 1043456
  %v61 = vsel %vm59, %v42, 0
  %63 = vmatprep.subr.bf16.mxu0 0
  %64 = vmatpush1.bf16.msra.mxu0 %v61
  %65 = vmatprep.subr.bf16.mxu0 0
  %66 = vmatpush1.bf16.msra.mxu0 0
  %67 = vmatprep.subr.bf16.mxu0 0
  %68 = vmatpush1.bf16.msra.mxu0 0
  %69 = vmatprep.subr.bf16.mxu0 0
  %70 = vmatpush1.bf16.msra.mxu0 0
  %71 = vmatprep.subr.bf16.mxu0 0
  %72 = vmatpush1.bf16.msra.mxu0 0
  %73 = vmatprep.subr.bf16.mxu0 0
  %74 = vmatpush1.bf16.msra.mxu0 0
  %75 = vmatprep.subr.bf16.mxu0 0
  %76 = vmatpush1.bf16.msra.mxu0 0
  %77 = vmatprep.subr.bf16.mxu0 0
  %78 = vmatpush1.bf16.msra.mxu0 0
  %79 = vmatprep.subr.bf16.mxu0 0
  %80 = vmatpush1.bf16.msra.mxu0 0
  %81 = vmatprep.subr.bf16.mxu0 0
  %82 = vmatpush1.bf16.msra.mxu0 0
  %83 = vmatprep.subr.bf16.mxu0 0
  %84 = vmatpush1.bf16.msra.mxu0 0
  %85 = vmatprep.subr.bf16.mxu0 0
  %86 = vmatpush1.bf16.msra.mxu0 0
  %87 = vmatprep.subr.bf16.mxu0 0
  %88 = vmatpush1.bf16.msra.mxu0 0
  %89 = vmatprep.subr.bf16.mxu0 0
  %90 = vmatpush1.bf16.msra.mxu0 0
  %91 = vmatprep.subr.bf16.mxu0 0
  %92 = vmatpush1.bf16.msra.mxu0 0
  %93 = vmatprep.subr.bf16.mxu0 0
  %94 = vmatpush1.bf16.msra.mxu0 0
  %95 = vmatprep.mubr.bf16.mxu0 0
  %96 = vmatmul.mubr.bf16.gmra.mrb[0].mxu0 %v57
  %v97 = vpop.f32.mrb[0].mxu0
  %v98 = vadd.f32 %v48, %v97
  %v99 = vpop.f32.mrb[0].mxu0
  %v100 = vpop.f32.mrb[0].mxu0
  %v101 = vadd.f32 %v48, %v100
  %v102 = vpop.f32.mrb[0].mxu0
  %103 = vdwg.mxu0
  %v104 = vmax.f32 %v98, 0.0
  %v105 = vmax.f32 %v101, 0.0
  %v106 = vpack.c.bf16 %v105, %v104
  %v107 = vld [vmem:[%s4] sm:$0xf]
  %v108 = vld [vmem:[%s4 + $0x4] sm:$0xf]
  %v109 = vld [vmem:[%s4 + $0x8] sm:$0xf]
  %v110 = vld [vmem:[%s4 + $0xc] sm:$0xf]
  %v111 = vld [vmem:[%s5] sm:$0x1]
  %v113 = vlaneseq
  %v114 = vshrl.u32 %v113, 7
  %v115 = vsub.s32 0, %v114
  %v116 = vrot.slane %v111, %v115
  %v122 = vunpack.c.l.b16 %v107
  %v123 = vunpack.c.l.b16 %v108
  %v124 = vunpack.c.l.b16 %v109
  %v125 = vunpack.c.l.b16 %v110
  %v126 = vpack.c.b16 %v123, %v122
  %v127 = vpack.c.b16 %v125, %v124
  %vm130 = vcmask 261120
  %v132 = vsel %vm130, %v106, 0
  %134 = vmatprep.subr.bf16.mxu0 0
  %135 = vmatpush1.bf16.msra.mxu0 %v126
  %136 = vmatprep.subr.bf16.mxu0 0
  %137 = vmatpush1.bf16.msra.mxu0 %v127
  %138 = vmatprep.subr.bf16.mxu0 0
  %139 = vmatpush1.bf16.msra.mxu0 0
  %140 = vmatprep.subr.bf16.mxu0 0
  %141 = vmatpush1.bf16.msra.mxu0 0
  %142 = vmatprep.subr.bf16.mxu0 0
  %143 = vmatpush1.bf16.msra.mxu0 0
  %144 = vmatprep.subr.bf16.mxu0 0
  %145 = vmatpush1.bf16.msra.mxu0 0
  %146 = vmatprep.subr.bf16.mxu0 0
  %147 = vmatpush1.bf16.msra.mxu0 0
  %148 = vmatprep.subr.bf16.mxu0 0
  %149 = vmatpush1.bf16.msra.mxu0 0
  %150 = vmatprep.subr.bf16.mxu0 0
  %151 = vmatpush1.bf16.msra.mxu0 0
  %152 = vmatprep.subr.bf16.mxu0 0
  %153 = vmatpush1.bf16.msra.mxu0 0
  %154 = vmatprep.subr.bf16.mxu0 0
  %155 = vmatpush1.bf16.msra.mxu0 0
  %156 = vmatprep.subr.bf16.mxu0 0
  %157 = vmatpush1.bf16.msra.mxu0 0
  %158 = vmatprep.subr.bf16.mxu0 0
  %159 = vmatpush1.bf16.msra.mxu0 0
  %160 = vmatprep.subr.bf16.mxu0 0
  %161 = vmatpush1.bf16.msra.mxu0 0
  %162 = vmatprep.subr.bf16.mxu0 0
  %163 = vmatpush1.bf16.msra.mxu0 0
  %164 = vmatprep.subr.bf16.mxu0 0
  %165 = vmatpush1.bf16.msra.mxu0 0
  %166 = vmatprep.mubr.bf16.mxu0 0
  %167 = vmatmul.mubr.bf16.gmra.mrb[0].mxu0 %v132
  %v168 = vpop.f32.mrb[0].mxu0
  %v169 = vadd.f32 %v116, %v168
  %v170 = vpop.f32.mrb[0].mxu0
  %v171 = vpop.f32.mrb[0].mxu0
  %v172 = vadd.f32 %v116, %v171
  %v173 = vpop.f32.mrb[0].mxu0
  %174 = vdwg.mxu0
  %v175 = vmax.f32 %v169, 0.0
  %v176 = vmax.f32 %v172, 0.0
  %v177 = vpack.c.bf16 %v176, %v175
  %v178 = vld [vmem:[%s6] sm:$0xf]
  %v179 = vld [vmem:[%s6 + $0x4] sm:$0xf]
  %v180 = vld [vmem:[%s6 + $0x8] sm:$0xf]
  %v181 = vld [vmem:[%s6 + $0xc] sm:$0xf]
  %v182 = vld [vmem:[%s7] sm:$0x1]
  %v184 = vlaneseq
  %v185 = vshrl.u32 %v184, 7
  %v186 = vsub.s32 0, %v185
  %v187 = vrot.slane %v182, %v186
  %v193 = vunpack.c.l.b16 %v178
  %v194 = vunpack.c.l.b16 %v179
  %v195 = vunpack.c.l.b16 %v180
  %v196 = vunpack.c.l.b16 %v181
  %v197 = vpack.c.b16 %v194, %v193
  %v198 = vpack.c.b16 %v196, %v195
  %v202 = vsel %vm130, %v177, 0
  %204 = vmatprep.subr.bf16.mxu0 0
  %205 = vmatpush1.bf16.msra.mxu0 %v197
  %206 = vmatprep.subr.bf16.mxu0 0
  %207 = vmatpush1.bf16.msra.mxu0 %v198
  %208 = vmatprep.subr.bf16.mxu0 0
  %209 = vmatpush1.bf16.msra.mxu0 0
  %210 = vmatprep.subr.bf16.mxu0 0
  %211 = vmatpush1.bf16.msra.mxu0 0
  %212 = vmatprep.subr.bf16.mxu0 0
  %213 = vmatpush1.bf16.msra.mxu0 0
  %214 = vmatprep.subr.bf16.mxu0 0
  %215 = vmatpush1.bf16.msra.mxu0 0
  %216 = vmatprep.subr.bf16.mxu0 0
  %217 = vmatpush1.bf16.msra.mxu0 0
  %218 = vmatprep.subr.bf16.mxu0 0
  %219 = vmatpush1.bf16.msra.mxu0 0
  %220 = vmatprep.subr.bf16.mxu0 0
  %221 = vmatpush1.bf16.msra.mxu0 0
  %222 = vmatprep.subr.bf16.mxu0 0
  %223 = vmatpush1.bf16.msra.mxu0 0
  %224 = vmatprep.subr.bf16.mxu0 0
  %225 = vmatpush1.bf16.msra.mxu0 0
  %226 = vmatprep.subr.bf16.mxu0 0
  %227 = vmatpush1.bf16.msra.mxu0 0
  %228 = vmatprep.subr.bf16.mxu0 0
  %229 = vmatpush1.bf16.msra.mxu0 0
  %230 = vmatprep.subr.bf16.mxu0 0
  %231 = vmatpush1.bf16.msra.mxu0 0
  %232 = vmatprep.subr.bf16.mxu0 0
  %233 = vmatpush1.bf16.msra.mxu0 0
  %234 = vmatprep.subr.bf16.mxu0 0
  %235 = vmatpush1.bf16.msra.mxu0 0
  %236 = vmatprep.mubr.bf16.mxu0 0
  %237 = vmatmul.mubr.bf16.gmra.mrb[0].mxu0 %v202
  %v238 = vpop.f32.mrb[0].mxu0
  %v239 = vadd.f32 %v187, %v238
  %v240 = vpop.f32.mrb[0].mxu0
  %v241 = vpop.f32.mrb[0].mxu0
  %v242 = vadd.f32 %v187, %v241
  %v243 = vpop.f32.mrb[0].mxu0
  %244 = vdwg.mxu0
  %v245 = vmax.f32 %v239, 0.0
  %v246 = vmax.f32 %v242, 0.0
  %v247 = vpack.c.bf16 %v246, %v245
  %v248 = vld [vmem:[%s8] sm:$0xf]
  %v249 = vld [vmem:[%s8 + $0x4] sm:$0xf]
  %v250 = vld [vmem:[%s8 + $0x8] sm:$0xf]
  %v251 = vld [vmem:[%s8 + $0xc] sm:$0xf]
  %v252 = vld [vmem:[%s9] sm:$0x1]
  %v254 = vlaneseq
  %v255 = vshrl.u32 %v254, 7
  %v256 = vsub.s32 0, %v255
  %v257 = vrot.slane %v252, %v256
  %v263 = vunpack.c.l.b16 %v248
  %v264 = vunpack.c.l.b16 %v249
  %v265 = vunpack.c.l.b16 %v250
  %v266 = vunpack.c.l.b16 %v251
  %v267 = vpack.c.b16 %v264, %v263
  %v268 = vpack.c.b16 %v266, %v265
  %v272 = vsel %vm130, %v247, 0
  %274 = vmatprep.subr.bf16.mxu0 0
  %275 = vmatpush1.bf16.msra.mxu0 %v267
  %276 = vmatprep.subr.bf16.mxu0 0
  %277 = vmatpush1.bf16.msra.mxu0 %v268
  %278 = vmatprep.subr.bf16.mxu0 0
  %279 = vmatpush1.bf16.msra.mxu0 0
  %280 = vmatprep.subr.bf16.mxu0 0
  %281 = vmatpush1.bf16.msra.mxu0 0
  %282 = vmatprep.subr.bf16.mxu0 0
  %283 = vmatpush1.bf16.msra.mxu0 0
  %284 = vmatprep.subr.bf16.mxu0 0
  %285 = vmatpush1.bf16.msra.mxu0 0
  %286 = vmatprep.subr.bf16.mxu0 0
  %287 = vmatpush1.bf16.msra.mxu0 0
  %288 = vmatprep.subr.bf16.mxu0 0
  %289 = vmatpush1.bf16.msra.mxu0 0
  %290 = vmatprep.subr.bf16.mxu0 0
  %291 = vmatpush1.bf16.msra.mxu0 0
  %292 = vmatprep.subr.bf16.mxu0 0
  %293 = vmatpush1.bf16.msra.mxu0 0
  %294 = vmatprep.subr.bf16.mxu0 0
  %295 = vmatpush1.bf16.msra.mxu0 0
  %296 = vmatprep.subr.bf16.mxu0 0
  %297 = vmatpush1.bf16.msra.mxu0 0
  %298 = vmatprep.subr.bf16.mxu0 0
  %299 = vmatpush1.bf16.msra.mxu0 0
  %300 = vmatprep.subr.bf16.mxu0 0
  %301 = vmatpush1.bf16.msra.mxu0 0
  %302 = vmatprep.subr.bf16.mxu0 0
  %303 = vmatpush1.bf16.msra.mxu0 0
  %304 = vmatprep.subr.bf16.mxu0 0
  %305 = vmatpush1.bf16.msra.mxu0 0
  %306 = vmatprep.mubr.bf16.mxu0 0
  %307 = vmatmul.mubr.bf16.gmra.mrb[0].mxu0 %v272
  %v308 = vpop.f32.mrb[0].mxu0
  %v309 = vadd.f32 %v257, %v308
  %v310 = vpop.f32.mrb[0].mxu0
  %v311 = vpop.f32.mrb[0].mxu0
  %v312 = vadd.f32 %v257, %v311
  %v313 = vpop.f32.mrb[0].mxu0
  %314 = vdwg.mxu0
  %v315 = vmax.f32 %v309, -20.0
  %v316 = vmax.f32 %v312, -20.0
  %v317 = vmin.f32 %v315, 2.0
  %v318 = vmin.f32 %v316, 2.0
  %v319 = vmul.f32 %v317, 1.442695
  %v320 = vpow.pop %v319
  %v321 = vmul.f32 %v318, 1.442695
  %v322 = vpow.pop %v321
  %325 = vrot.lane.b32.xlu0 %v38, 4
  %v326 = vpop.permute.xlu0 %325
  %327 = vrot.lane.b32.xlu0 %v39, 4
  %v328 = vpop.permute.xlu0 %327
  %v331 = vmul.f32 %v320, %v326
  %v332 = vmul.f32 %v322, %v328
  %335 = vrot.lane.b32.xlu0 %v331, 124
  %v336 = vpop.permute.xlu0 %335
  %337 = vrot.lane.b32.xlu0 %v332, 124
  %v338 = vpop.permute.xlu0 %337
  %v341 = vadd.f32 %v309, %v336
  %v342 = vadd.f32 %v312, %v338
  %v343 = vmul.f32 %v38, -0.5
  %v344 = vmul.f32 %v39, -0.5
  %v345 = vmul.f32 %v343, %v38
  %v346 = vmul.f32 %v344, %v39
  %349 = vrot.lane.b32.xlu0 %v317, 124
  %v350 = vpop.permute.xlu0 %349
  %351 = vrot.lane.b32.xlu0 %v318, 124
  %v352 = vpop.permute.xlu0 %351
  %v355 = vsub.f32 %v345, %v350
  %v356 = vsub.f32 %v346, %v352
  %v357 = vsub.f32 %v355, 0.9189385
  %v358 = vsub.f32 %v356, 0.9189385
  %vm359 = vcmask 31744
  %v360 = vsel %vm359, %v357, 0.0
  %361 = vadd.xlane.f32.xlu0 %v360
  %v362 = vpop.xlane.xlu0 %361
  %v363 = vsel %vm359, %v358, 0.0
  %364 = vadd.xlane.f32.xlu0 %v363
  %v365 = vpop.xlane.xlu0 %364
  %v366 = vtanh.pop %v341
  %v367 = vtanh.pop %v342
  %v368 = vmul.f32 %v366, %v366
  %v369 = vmul.f32 %v367, %v367
  %v370 = vsub.f32 1.0, %v368
  %v371 = vsub.f32 1.0, %v369
  %v372 = vadd.f32 %v370, 1e-06
  %v373 = vadd.f32 %v371, 1e-06
  %v374 = vlog2.pop %v372
  %v375 = vmul.f32 %v374, 0.6931472
  %v376 = vlog2.pop %v373
  %v377 = vmul.f32 %v376, 0.6931472
  %v378 = vsel %vm359, %v375, 0.0
  %379 = vadd.xlane.f32.xlu0 %v378
  %v380 = vpop.xlane.xlu0 %379
  %v381 = vsel %vm359, %v377, 0.0
  %382 = vadd.xlane.f32.xlu0 %v381
  %v383 = vpop.xlane.xlu0 %382
  %v384 = vsub.f32 %v362, %v380
  %v385 = vsub.f32 %v365, %v383
  %386 = vst.msk [vmem:[%s10] sm:$0xff] %vm359, %v366
  %387 = vst.msk [vmem:[%s10 + $0x8] sm:$0xff] %vm359, %v367
  %vm388 = vcmask 7168
  %389 = vst.msk [vmem:[%s11] sm:$0xff] %vm388, %v384
  %390 = vst.msk [vmem:[%s11 + $0x8] sm:$0xff] %vm388, %v385
  // Predicated region
  $region42: #{tpu_custom_call.1} parent=0 // pred_check
    _
  $region43: #{tpu_custom_call.1} parent=0 // pred_check_branch
    %392 = sbr.rel (0) target = $region45
  $region44: #{tpu_custom_call.1} parent=0 // pred_region
    _
  $region45: #{tpu_custom_call.1} parent=0 // pred_fallthru
    _
  // Predicated region
  $region46: #{tpu_custom_call.1} parent=0 // pred_check
    _
  $region47: #{tpu_custom_call.1} parent=0 // pred_check_branch
    %394 = sbr.rel (0) target = $region49
  $region48: #{tpu_custom_call.1} parent=0 // pred_region
    _
  $region49: #{tpu_custom_call.1} parent=0 // pred_fallthru
    _
  // Predicated region
  $region50: #{tpu_custom_call.1} parent=0 // pred_check
    _
  $region51: #{tpu_custom_call.1} parent=0 // pred_check_branch
    %396 = sbr.rel (0) target = $region53
  $region52: #{tpu_custom_call.1} parent=0 // pred_region
    _
  $region53: #{tpu_custom_call.1} parent=0 // pred_fallthru
    _
  // Predicated region
  $region54: #{tpu_custom_call.1} parent=0 // pred_check
    _
  $region55: #{tpu_custom_call.1} parent=0 // pred_check_branch
    %398 = sbr.rel (0) target = $region57
  $region56: #{tpu_custom_call.1} parent=0 // pred_region
    _
  $region57: #{tpu_custom_call.1} parent=0 // pred_fallthru
    _

</llo_original>
